<compile_context>
chip_gen: v6e
topology: v6e:2x2x1
jax: 0.10.0
libtpu: 0.0.40
codegen_flags: <defaults>
</compile_context>

<pallas_src>
import functools

import jax
import jax.numpy as jnp
from jax import lax
from jax.experimental import pallas as pl
from jax.experimental.pallas import tpu as pltpu


# ---------------------------------------------------------------------------
# Kernel 1: channel mean + max pooling, lane-dense over flattened H*W.
# ---------------------------------------------------------------------------
def _channel_pool_kernel(inv_c, x_ref, out_ref, acc_ref):
    """Grid = (B, S_tiles, C_tiles); the trailing C axis is the reduction axis.

    x_ref   : (1, CT, ST)   channel tile of x, spatial dims flattened (lane-dense)
    out_ref : (1, 2, ST)    row 0 = mean, row 1 = max; resident across the C axis
    acc_ref : (2, ST) f32   running sum (row 0) / running max (row 1) scratch
    """
    c = pl.program_id(2)
    xb = x_ref[0].astype(jnp.float32)            # upcast so bf16/int8 inputs work
    psum = jnp.sum(xb, axis=0, keepdims=True)    # (1, ST)
    pmax = jnp.max(xb, axis=0, keepdims=True)    # (1, ST)

    @pl.when(c == 0)
    def _init():
        acc_ref[0:1, :] = psum
        acc_ref[1:2, :] = pmax

    @pl.when(c != 0)
    def _accumulate():
        acc_ref[0:1, :] = acc_ref[0:1, :] + psum
        acc_ref[1:2, :] = jnp.maximum(acc_ref[1:2, :], pmax)

    @pl.when(c == pl.num_programs(2) - 1)
    def _finalize():                             # single write of the out block
        out_ref[0, 0:1, :] = acc_ref[0:1, :] * inv_c
        out_ref[0, 1:2, :] = acc_ref[1:2, :]


# ---------------------------------------------------------------------------
# Kernel 2: 7x7 (2 -> 1) conv over zero-padded [mean; max] maps + sigmoid.
# ---------------------------------------------------------------------------
def _spatial_conv_kernel(H, W, KS, PAD, R0, TH, pooled_ref, wsa_ref, out_ref,
                         pad_ref):
    """Grid = (B,), 'parallel' (megacore-shardable on v7x).

    pooled_ref : (1, 2, H, W)             mean/max maps from kernel 1
    wsa_ref    : (2*KS*KS,) in SMEM       conv weight, flattened (ci, di, dj)
    out_ref    : (1, 1, H, W)
    pad_ref    : (2, R0+H+PAD, W+2*PAD)   zero-bordered staging planes (VMEM)
    """
    Wp = W + 2 * PAD

    for ci in range(2):
        # Re-zero only the thin border strips every step (O(PAD*(H+W)) stores),
        # so each grid step is self-contained and the batch axis can be split
        # across TensorCores.  Rows below R0-PAD are never read by any tap.
        if PAD > 0:
            pad_ref[ci, R0 - PAD:R0, :] = jnp.zeros((PAD, Wp), jnp.float32)
            pad_ref[ci, R0 + H:R0 + H + PAD, :] = jnp.zeros((PAD, Wp), jnp.float32)
            pad_ref[ci, R0:R0 + H, 0:PAD] = jnp.zeros((H, PAD), jnp.float32)
            pad_ref[ci, R0:R0 + H, PAD + W:Wp] = jnp.zeros((H, PAD), jnp.float32)
        # Payload at a sublane-aligned row offset R0 and lane offset PAD.
        pad_ref[ci, R0:R0 + H, PAD:PAD + W] = pooled_ref[0, ci].astype(jnp.float32)

    # Hoist the 2*KS*KS scalar weight reads (SMEM sld) out of the tap loops.
    wts = [wsa_ref[i] for i in range(2 * KS * KS)]

    def conv_rows(r0, nrows):
        """Accumulate `nrows` output rows starting at r0; acc stays in vregs."""
        acc = jnp.zeros((nrows, W), jnp.float32)
        for ci in range(2):
            for dj in range(KS):
                # One lane-shifted slab per (ci, dj), kept as a VALUE (no VMEM
                # round-trip): pad rows r0-PAD .. r0+nrows+PAD, cols dj..dj+W.
                slab = pad_ref[ci, pl.ds(R0 - PAD + r0, nrows + KS - 1), dj:dj + W]
                for di in range(KS):
                    acc = acc + wts[ci * KS * KS + di * KS + dj] * slab[di:di + nrows, :]
        out_ref[0, 0, pl.ds(r0, nrows), :] = jax.nn.sigmoid(acc)

    n_full = H // TH
    rem = H - n_full * TH
    if n_full == 1 and rem == 0:
        conv_rows(0, H)                           # whole map fits one acc tile
    else:
        def body(t, carry):
            conv_rows(pl.multiple_of(t * TH, 8), TH)
            return carry
        lax.fori_loop(0, n_full, body, 0)
        if rem:
            conv_rows(n_full * TH, rem)           # static remainder tile

    # TODO(synk): for W < 128, pack floor(128/(W+2*PAD)) image rows along the
    # lane dimension (pitch W+2*PAD, zero columns as guards) to raise lane
    # occupancy of the tap FMAs; the current layout wastes lanes on small maps.


# ---------------------------------------------------------------------------
# Tile pickers / VMEM sizing helpers.
# ---------------------------------------------------------------------------
def _round_up(n, m):
    return -(-n // m) * m


def _vmem_cap_bytes(frac=0.75, fallback=48 * 2**20):
    """Generation-aware scoped-VMEM ceiling (v7x: 64 MiB physical; v5e/v6e: 128)."""
    try:
        cap = getattr(pltpu.get_tpu_info(), "vmem_capacity_bytes", None)
        if cap:
            return int(cap * frac)
    except Exception:
        pass
    return fallback


def _pick_pool_tiles(C, S, itemsize, budget, pack):
    """(CT, ST) for the (C, S) pooling input: lane-dense, ~`budget`-sized blocks."""
    # Spatial tile: a multiple-of-128 divisor of S (or the full extent).
    if S % 128 != 0 or C * S * itemsize <= budget:
        st = S
    else:
        max_st = max(128, budget // (itemsize * pack))
        st, cand = 128, 256
        while cand <= S:
            if S % cand == 0 and cand <= max_st:
                st = cand
            cand += 128
    # Channel tile: biggest pack-aligned divisor of C whose block fits `budget`.
    if C <= pack or C % pack != 0 or C * st * itemsize <= budget:
        ct = C
    else:
        ct, cand = pack, 2 * pack
        while cand < C:
            if C % cand == 0 and cand * st * itemsize <= budget:
                ct = cand
            cand += pack
    return ct, st


def _pick_row_tile(H, W):
    """Output rows per conv accumulator tile: keep acc + one slab in vregs."""
    budget_elems = 32 * 1024                      # ~128 KiB of f32 in the vreg file
    th = (budget_elems // max(W, 1) - 6) // 2
    th = max(8, min(32, 8 * (th // 8)))
    return min(H, th)


# ---------------------------------------------------------------------------
# Wrapper
# ---------------------------------------------------------------------------
def spatial_attention(x, wsa):
    """sigmoid(conv7x7([mean_c(x); max_c(x)])) — PyTorch SpatialAttention forward."""
    B, C, H, W = x.shape
    assert wsa.ndim == 4 and wsa.shape[:2] == (1, 2) and wsa.shape[2] == wsa.shape[3], wsa.shape
    KS = wsa.shape[-1]
    PAD = (KS - 1) // 2               # module default: kernel_size=7, padding=3 ("same")

    S = H * W
    itemsize = jnp.dtype(x.dtype).itemsize
    pack = max(8, 32 // itemsize)     # native sublane packing: 8 f32 / 16 bf16 / 32 int8
    vmem_cap = _vmem_cap_bytes()

    # ---- Kernel 1: lane-dense channel mean/max pooling ----------------------
    blk_budget = int(min(8 * 2**20, vmem_cap // 4))   # 4-8 MiB blocks, double-buffered
    CT, ST = _pick_pool_tiles(C, S, itemsize, blk_budget, pack)
    NS, NC = S // ST, C // CT

    x_flat = x.reshape(B, C, S)                        # metadata-only HBM reshape
    k1_bytes = (2 * CT * ST * itemsize                 # double-buffered input block
                + 2 * 8 * ST * 4                       # double-buffered (1,2,ST) output
                + 8 * ST * 4                           # (2,ST) accumulator scratch
                + (2 << 20))                           # compiler headroom
    vmem_limit1 = int(min(vmem_cap, max(k1_bytes, 16 << 20)))

    pooled = pl.pallas_call(
        functools.partial(_channel_pool_kernel, 1.0 / C),
        out_shape=jax.ShapeDtypeStruct((B, 2, S), jnp.float32),
        grid_spec=pltpu.PrefetchScalarGridSpec(
            num_scalar_prefetch=0,
            grid=(B, NS, NC),
            in_specs=[pl.BlockSpec((1, CT, ST), lambda b, s, c: (b, c, s))],
            out_specs=pl.BlockSpec((1, 2, ST), lambda b, s, c: (b, 0, s)),
            scratch_shapes=[pltpu.VMEM((2, ST), jnp.float32)],
        ),
        compiler_params=pltpu.CompilerParams(
            dimension_semantics=("parallel", "parallel", "arbitrary"),
            vmem_limit_bytes=vmem_limit1),
    )(x_flat)

    # ---- Kernel 2: 7x7 spatial conv + sigmoid --------------------------------
    pooled_2d = pooled.reshape(B, 2, H, W)             # metadata-only HBM reshape
    wsa_flat = wsa.reshape(-1).astype(jnp.float32)     # (2*KS*KS,) for SMEM
    R0 = max(8, _round_up(PAD, 8))                     # sublane-aligned payload row
    Wp = W + 2 * PAD
    TH = _pick_row_tile(H, W)

    k2_bytes = (2 * 2 * _round_up(H, 8) * _round_up(W, 128) * 4            # pooled x2
                + 2 * _round_up(H, 8) * _round_up(W, 128) * 4              # out x2
                + 2 * _round_up(R0 + H + PAD, 8) * _round_up(Wp, 128) * 4  # pad scratch
                + (2 << 20))
    vmem_limit2 = int(min(vmem_cap, max(k2_bytes, 16 << 20)))
    # TODO(synk): for feature maps too large for a single VMEM block, add a grid
    # row-tile axis with a PAD-row halo instead of one (1,2,H,W) block per step.

    out = pl.pallas_call(
        functools.partial(_spatial_conv_kernel, H, W, KS, PAD, R0, TH),
        out_shape=jax.ShapeDtypeStruct((B, 1, H, W), jnp.float32),
        grid_spec=pltpu.PrefetchScalarGridSpec(
            num_scalar_prefetch=0,
            grid=(B,),
            in_specs=[
                pl.BlockSpec((1, 2, H, W), lambda b: (b, 0, 0, 0)),
                pl.BlockSpec(memory_space=pltpu.MemorySpace.SMEM),
            ],
            out_specs=pl.BlockSpec((1, 1, H, W), lambda b: (b, 0, 0, 0)),
            scratch_shapes=[
                pltpu.VMEM((2, R0 + H + PAD, Wp), jnp.float32),
            ],
        ),
        compiler_params=pltpu.CompilerParams(
            dimension_semantics=("parallel",),
            vmem_limit_bytes=vmem_limit2),
    )(pooled_2d, wsa_flat)
    return out


# ---------------------------------------------------------------------------
# Pure-JAX reference mirroring the PyTorch forward.
# ---------------------------------------------------------------------------
def reference(x, wsa):
    avg = jnp.mean(x, axis=1, keepdims=True)
    mx = jnp.max(x, axis=1, keepdims=True)
    cat = jnp.concatenate([avg, mx], axis=1)           # (B, 2, H, W)
    pad = (wsa.shape[-1] - 1) // 2
    conv = lax.conv_general_dilated(
        cat, wsa, window_strides=(1, 1), padding=((pad, pad), (pad, pad)),
        dimension_numbers=("NCHW", "OIHW", "NCHW"))
    return jax.nn.sigmoid(conv)                        # (B, 1, H, W)


if __name__ == "__main__":
    key = jax.random.PRNGKey(0)
    B, C, H, W = 2, 32, 16, 16
    ksize = 7

    kx, kw = jax.random.split(key)
    x = jax.random.normal(kx, (B, C, H, W), jnp.float32)
    wsa = 0.1 * jax.random.normal(kw, (1, 2, ksize, ksize), jnp.float32)

    out = spatial_attention(x, wsa)
    out = jax.block_until_ready(out)

    ref = reference(x, wsa)
    assert out.shape == (B, 1, H, W)
    err = float(jnp.max(jnp.abs(out - ref)))
    if err > 1e-4:
        raise AssertionError(f"kernel/reference mismatch, max abs err = {err}")
    print("KERNEL_OK")
</pallas_src>

<mosaic_0001>
module attributes {stable_mosaic.version = 11 : i64} {
  func.func @_channel_pool_kernel(%arg0: i32, %arg1: i32, %arg2: i32, %arg3: memref<1x32x256xf32, #tpu.memory_space<vmem>>, %arg4: memref<1x2x256xf32, #tpu.memory_space<vmem>>, %arg5: memref<2x256xf32, #tpu.memory_space<vmem>>) attributes {dimension_semantics = [#tpu.dimension_semantics<parallel>, #tpu.dimension_semantics<parallel>, #tpu.dimension_semantics<arbitrary>], iteration_bounds = array<i64: 2, 1, 1>, scalar_prefetch = 0 : i64, scratch_operands = 1 : i64, tpu.core_type = #tpu.core_type<tc>, window_params = [{transform_indices = @transform_0, window_bounds = array<i64: 1, 32, 256>}, {transform_indices = @transform_1, window_bounds = array<i64: 1, 2, 256>}]} {
    %c0 = arith.constant 0 : index
    %c0_0 = arith.constant 0 : index
    %c0_1 = arith.constant 0 : index
    %0 = vector.load %arg3[%c0, %c0_0, %c0_1] : memref<1x32x256xf32, #tpu.memory_space<vmem>>, vector<1x32x256xf32>
    %1 = vector.shape_cast %0 : vector<1x32x256xf32> to vector<32x256xf32>
    %cst = arith.constant dense<0.000000e+00> : vector<256xf32>
    %2 = vector.multi_reduction <add>, %1, %cst [0] : vector<32x256xf32> to vector<256xf32>
    %3 = vector.shape_cast %2 : vector<256xf32> to vector<1x256xf32>
    %cst_2 = arith.constant dense<0xFF800000> : vector<256xf32>
    %4 = vector.multi_reduction <maximumf>, %1, %cst_2 [0] : vector<32x256xf32> to vector<256xf32>
    %5 = vector.shape_cast %4 : vector<256xf32> to vector<1x256xf32>
    %c0_i32 = arith.constant 0 : i32
    %6 = arith.cmpi eq, %arg2, %c0_i32 : i32
    %7 = arith.extui %6 : i1 to i32
    %c0_i32_3 = arith.constant 0 : i32
    %8 = arith.cmpi ne, %7, %c0_i32_3 : i32
    scf.if %8 {
      %c0_8 = arith.constant 0 : index
      %c0_9 = arith.constant 0 : index
      %15 = vector.load %arg5[%c0_8, %c0_9] : memref<2x256xf32, #tpu.memory_space<vmem>>, vector<1x256xf32>
      tpu.vector_store %arg5[%c0_8, %c0_9], %3 {strides = array<i32>} : memref<2x256xf32, #tpu.memory_space<vmem>>, vector<1x256xf32>,
      %c1 = arith.constant 1 : index
      %c0_10 = arith.constant 0 : index
      %16 = vector.load %arg5[%c1, %c0_10] : memref<2x256xf32, #tpu.memory_space<vmem>>, vector<1x256xf32>
      tpu.vector_store %arg5[%c1, %c0_10], %5 {strides = array<i32>} : memref<2x256xf32, #tpu.memory_space<vmem>>, vector<1x256xf32>,
    } else {
    }
    %c0_i32_4 = arith.constant 0 : i32
    %9 = arith.cmpi ne, %arg2, %c0_i32_4 : i32
    %10 = arith.extui %9 : i1 to i32
    %c0_i32_5 = arith.constant 0 : i32
    %11 = arith.cmpi ne, %10, %c0_i32_5 : i32
    scf.if %11 {
      %c0_8 = arith.constant 0 : index
      %c0_9 = arith.constant 0 : index
      %15 = vector.load %arg5[%c0_8, %c0_9] : memref<2x256xf32, #tpu.memory_space<vmem>>, vector<1x256xf32>
      %16 = arith.addf %15, %3 : vector<1x256xf32>
      %c0_10 = arith.constant 0 : index
      %c0_11 = arith.constant 0 : index
      %17 = vector.load %arg5[%c0_10, %c0_11] : memref<2x256xf32, #tpu.memory_space<vmem>>, vector<1x256xf32>
      tpu.vector_store %arg5[%c0_10, %c0_11], %16 {strides = array<i32>} : memref<2x256xf32, #tpu.memory_space<vmem>>, vector<1x256xf32>,
      %c1 = arith.constant 1 : index
      %c0_12 = arith.constant 0 : index
      %18 = vector.load %arg5[%c1, %c0_12] : memref<2x256xf32, #tpu.memory_space<vmem>>, vector<1x256xf32>
      %19 = arith.maximumf %18, %5 : vector<1x256xf32>
      %c1_13 = arith.constant 1 : index
      %c0_14 = arith.constant 0 : index
      %20 = vector.load %arg5[%c1_13, %c0_14] : memref<2x256xf32, #tpu.memory_space<vmem>>, vector<1x256xf32>
      tpu.vector_store %arg5[%c1_13, %c0_14], %19 {strides = array<i32>} : memref<2x256xf32, #tpu.memory_space<vmem>>, vector<1x256xf32>,
    } else {
    }
    %c0_i32_6 = arith.constant 0 : i32
    %12 = arith.cmpi eq, %arg2, %c0_i32_6 : i32
    %13 = arith.extui %12 : i1 to i32
    %c0_i32_7 = arith.constant 0 : i32
    %14 = arith.cmpi ne, %13, %c0_i32_7 : i32
    scf.if %14 {
      %c0_8 = arith.constant 0 : index
      %c0_9 = arith.constant 0 : index
      %15 = vector.load %arg5[%c0_8, %c0_9] : memref<2x256xf32, #tpu.memory_space<vmem>>, vector<1x256xf32>
      %cst_10 = arith.constant 3.125000e-02 : f32
      %16 = vector.broadcast %cst_10 : f32 to vector<1x256xf32>
      %17 = arith.mulf %15, %16 : vector<1x256xf32>
      %c0_11 = arith.constant 0 : index
      %c0_12 = arith.constant 0 : index
      %c0_13 = arith.constant 0 : index
      %18 = vector.load %arg4[%c0_11, %c0_12, %c0_13] : memref<1x2x256xf32, #tpu.memory_space<vmem>>, vector<1x1x256xf32>
      %19 = vector.shape_cast %18 : vector<1x1x256xf32> to vector<1x256xf32>
      %20 = vector.shape_cast %17 : vector<1x256xf32> to vector<1x1x256xf32>
      tpu.vector_store %arg4[%c0_11, %c0_12, %c0_13], %20 {strides = array<i32>} : memref<1x2x256xf32, #tpu.memory_space<vmem>>, vector<1x1x256xf32>,
      %c1 = arith.constant 1 : index
      %c0_14 = arith.constant 0 : index
      %21 = vector.load %arg5[%c1, %c0_14] : memref<2x256xf32, #tpu.memory_space<vmem>>, vector<1x256xf32>
      %c0_15 = arith.constant 0 : index
      %c1_16 = arith.constant 1 : index
      %c0_17 = arith.constant 0 : index
      %22 = vector.load %arg4[%c0_15, %c1_16, %c0_17] : memref<1x2x256xf32, #tpu.memory_space<vmem>>, vector<1x1x256xf32>
      %23 = vector.shape_cast %22 : vector<1x1x256xf32> to vector<1x256xf32>
      %24 = vector.shape_cast %21 : vector<1x256xf32> to vector<1x1x256xf32>
      tpu.vector_store %arg4[%c0_15, %c1_16, %c0_17], %24 {strides = array<i32>} : memref<1x2x256xf32, #tpu.memory_space<vmem>>, vector<1x1x256xf32>,
    } else {
    }
    return
  }
  func.func @transform_0(%arg0: i32, %arg1: i32, %arg2: i32) -> (i32, i32, i32) {
    %c0_i32 = arith.constant 0 : i32
    return %arg0, %arg2, %arg1 : i32, i32, i32
  }
  func.func @transform_1(%arg0: i32, %arg1: i32, %arg2: i32) -> (i32, i32, i32) {
    %c0_i32 = arith.constant 0 : i32
    %c0_i32_0 = arith.constant 0 : i32
    return %arg0, %c0_i32, %arg1 : i32, i32, i32
  }
}

</mosaic_0001>

<llo_original>
// kernel: tpu_custom_call.1
$region0: #{tpu_custom_call.1}
  #allocation0 [shape = 'u32[]', space=smem, size = 0x4, offset = 0x4, fixed_abs, tag = 'smem constant byte address 0x4 - core index']
  #allocation1 [shape = 'u32[144,128]{1,0:T(1,128)}', space=vmem, size = 0x12000, scoped, tag = 'internal scratch']
  #allocation2 [shape = 'f32[2,256]{1,0:T(2,128)}', space=vmem, size = 0x800, scoped, tag = 'scratch operand']
  %s0 = inlined_call_operand.hbm [shape: f32[2,32,256], index: 0, kind: input, shape index: {}]
  %s1 = inlined_call_operand.hbm [shape: f32[2,2,256], index: 1, kind: output, shape index: {}]
  %s2 = sld [smem:[#allocation0]]
  $region53: #{tpu_custom_call.1} parent=0
    _
  %s4 = ssub.s32 1, %s2
  %s5 = scalar_select 0, %s4, %s2
  $region1: #{tpu_custom_call.1} parent=0
    #allocation3 [shape = 'u8[65536]{0}', space=vmem, size = 0x10000, scoped, tag = 'input window, operand 0']
    #allocation4 [shape = 's32[2]{0}', space=sflag, size = 0x8, scoped, tag = 'scoped memory for tpu_custom_call.1']
    #allocation5 [shape = 's32[2]{0}', space=sflag, size = 0x8, scoped, tag = 'scoped memory for tpu_custom_call.1']
    #allocation6 [shape = 'u8[4096]{0}', space=vmem, size = 0x1000, scoped, tag = 'output window, operand 0']
    %6 = vsyncpa [#allocation4], 0
    %s7 = scalar_lea.sflag [#allocation4], 1
    %8 = vsyncpa %s7, 0
    %9 = vsyncpa [#allocation5], 0
    %s10 = scalar_lea.sflag [#allocation5], 1
    %11 = vsyncpa %s10, 0
    loop: start=0, step=1, limit=4
    $region2: #{tpu_custom_call.1} parent=1 // loop_pre_header
      _
    $region3: #{tpu_custom_call.1} parent=1 // loop_header
      %s13 = sphi 0, %s17
      %p14 = scmp.ge.s32.totalorder %s13, 4
      %s20 = sphi 0, %s39
      %s21 = sphi 0, %s35
      %s22 = sphi 0, %s31
      %s23 = sphi 0, %s20
      %s24 = sphi 0, %s21
      %s25 = sphi 0, %s22
      %s26 = sphi 0, %s23
      %s27 = sphi 0, %s24
      %s28 = sphi 0, %s25
      %s46 = sphi 0, %s48
      %s49 = sphi 0, %s46
      %s50 = sphi 0, %s49
      %s66 = sphi 0, %s50
      %s74 = sphi 0, %s76
      %s77 = sphi 0, %s74
      %s78 = sphi 0, %s77
      %s94 = sphi 0, %s78
    $region4: #{tpu_custom_call.1} parent=1 // loop_header_branch
      %16 = sbr.rel (%p14) target = $region8
    $region5: #{tpu_custom_call.1} parent=1 // loop_body
      %s18 = ssub.s32 %s13, 1
      %s19 = ssub.s32 %s13, 2
      %s29 = sadd.s32 1, %s22
      %p30 = scmp.ge.s32.totalorder %s29, 1
      %s31 = scalar_select %p30, 0, %s29
      %s32 = sadd.s32 1, %s21
      %s33 = scalar_select %p30, %s32, %s21
      %p34 = scmp.ge.s32.totalorder %s33, 1
      %s35 = scalar_select %p34, 0, %s33
      %s36 = sadd.s32 1, %s20
      %s37 = scalar_select %p34, %s36, %s20
      %p38 = scmp.ge.s32.totalorder %s37, 2
      %s39 = scalar_select %p38, 0, %s37
      %s40 = ssub.s32 %s20, %s39
      %s41 = ssub.s32 %s22, %s31
      %s42 = sor.u32 %s40, %s41
      %s43 = ssub.s32 %s21, %s35
      %s44 = sor.u32 %s42, %s43
      %p45 = scmp.eq.s32.totalorder %s44, 0
      %s47 = sadd.s32 %s46, 1
      %s48 = scalar_select %p45, %s46, %s47
      %p51 = pneg %p45
      %p52 = scmp.eq.s32.totalorder %s13, 1
      %p53 = por %p51, %p52
      %p54 = scmp.ne.s32.totalorder %s46, %s49
      %p55 = scmp.eq.s32.totalorder %s13, 0
      %p56 = por %p54, %p55
      %p57 = scmp.ne.s32.totalorder %s46, %s49
      %p58 = scmp.eq.s32.totalorder %s18, 1
      %p59 = por %p57, %p58
      %p60 = scmp.ne.s32.totalorder %s49, %s50
      %p61 = scmp.eq.s32.totalorder %s18, 0
      %p62 = por %p60, %p61
      %p63 = scmp.ne.s32.totalorder %s49, %s50
      %p64 = scmp.eq.s32.totalorder %s19, 1
      %p65 = por %p63, %p64
      %p67 = scmp.ne.s32.totalorder %s50, %s66
      %p68 = scmp.eq.s32.totalorder %s19, 0
      %p69 = por %p67, %p68
      %s70 = ssub.s32 %s20, %s39
      %s71 = ssub.s32 %s21, %s35
      %s72 = sor.u32 %s70, %s71
      %p73 = scmp.eq.s32.totalorder %s72, 0
      %s75 = sadd.s32 %s74, 1
      %s76 = scalar_select %p73, %s74, %s75
      %p79 = pneg %p73
      %p80 = scmp.eq.s32.totalorder %s13, 1
      %p81 = por %p79, %p80
      %p82 = scmp.ne.s32.totalorder %s74, %s77
      %p83 = scmp.eq.s32.totalorder %s13, 0
      %p84 = por %p82, %p83
      %p85 = scmp.ne.s32.totalorder %s74, %s77
      %p86 = scmp.eq.s32.totalorder %s18, 1
      %p87 = por %p85, %p86
      %p88 = scmp.ne.s32.totalorder %s77, %s78
      %p89 = scmp.eq.s32.totalorder %s18, 0
      %p90 = por %p88, %p89
      %p91 = scmp.ne.s32.totalorder %s77, %s78
      %p92 = scmp.eq.s32.totalorder %s19, 1
      %p93 = por %p91, %p92
      %p95 = scmp.ne.s32.totalorder %s78, %s94
      %p96 = scmp.eq.s32.totalorder %s19, 0
      %p97 = por %p95, %p96
      %p98 = scmp.le.s32.totalorder 1, %s13
      %p99 = scmp.lt.s32.totalorder %s13, 3
      %p100 = pnand %p98, %p99
      %p101 = pneg %p100
      // Predicated region
      $region9: #{tpu_custom_call.1} parent=5 // pred_check
        _
      $region10: #{tpu_custom_call.1} parent=5 // pred_check_branch
        %103 = sbr.rel (%p100) target = $region12
      $region11: #{tpu_custom_call.1} parent=5 // pred_region
        %s104 = ssub.s32 %s13, 1
      $region12: #{tpu_custom_call.1} parent=5 // pred_fallthru
        _
      %p105 = scmp.lt.s32.totalorder %s13, 2
      // Predicated region
      $region13: #{tpu_custom_call.1} parent=5 // pred_check
        %p106 = pneg %p105
      $region14: #{tpu_custom_call.1} parent=5 // pred_check_branch
        %108 = sbr.rel (%p106) target = $region16
      $region15: #{tpu_custom_call.1} parent=5 // pred_region
        // Predicated region
        $region17: #{tpu_custom_call.1} parent=15 // pred_check
          %p109 = pneg %p56
        $region18: #{tpu_custom_call.1} parent=15 // pred_check_branch
          %111 = sbr.rel (%p109) target = $region20
        $region19: #{tpu_custom_call.1} parent=15 // pred_region
          %s112 = sand.u32 %s46, 1
          %s113 = scalar_lea.sflag [#allocation4], %s112
          %s114 = sand.u32 %s46, 1
          %s115 = smul.addr %s114, 64
          %s116 = scalar_lea.vmem [#allocation3], %s115
          %s117 = smul.u32 4, %s22
          %s118 = smul.u32 2, %s21
          %s120 = ssub.s32 1024, 1024
          %121 = vsyncadd %s113, %s120
          %s122 = smul.addr %s117, 2
          %s123 = sadd.s32 %s118, %s122
          %s124 = smul.addr %s20, 8
          %s125 = sadd.s32 %s123, %s124
          %s126 = smul.addr %s125, 128
          %s127 = scalar_lea.hbm %s0, %s126
          %s128 = sshll.u32 %s116, 4
          %s129 = int_to_ptr.vmem [resolvable:$true] %s128
          %134 = dma.hbm_to_vmem [thread:$0]  %s127, 1024, %s129, %s113, 256, 256, 16
        $region20: #{tpu_custom_call.1} parent=15 // pred_fallthru
          _
      $region16: #{tpu_custom_call.1} parent=5 // pred_fallthru
        _
      %p135 = scmp.le.s32.totalorder 1, %s13
      %p136 = scmp.lt.s32.totalorder %s13, 3
      %p137 = pnand %p135, %p136
      %p138 = pneg %p137
      // Predicated region
      $region21: #{tpu_custom_call.1} parent=5 // pred_check
        _
      $region22: #{tpu_custom_call.1} parent=5 // pred_check_branch
        %140 = sbr.rel (%p137) target = $region24
      $region23: #{tpu_custom_call.1} parent=5 // pred_region
        %s141 = ssub.s32 %s13, 1
        %s142 = sand.u32 %s49, 1
        %s143 = scalar_lea.sflag [#allocation4], %s142
        %s144 = sand.u32 %s49, 1
        %s145 = smul.addr %s144, 64
        %s146 = scalar_lea.vmem [#allocation3], %s145
        // Predicated region
        $region25: #{tpu_custom_call.1} parent=23 // pred_check
          %p147 = pneg %p62
        $region26: #{tpu_custom_call.1} parent=23 // pred_check_branch
          %149 = sbr.rel (%p147) target = $region28
        $region27: #{tpu_custom_call.1} parent=23 // pred_region
          %150 = dma.done %s143, 1024
        $region28: #{tpu_custom_call.1} parent=23 // pred_fallthru
          _
        %s151 = sand.u32 %s49, 1
        %s152 = scalar_lea.sflag [#allocation4], %s151
        %s153 = sand.u32 %s49, 1
        %s154 = smul.addr %s153, 64
        %s155 = scalar_lea.vmem [#allocation3], %s154
        %p156 = pneg %p62
        %p157 = pneg %p59
        %p158 = pneg %p90
        %p159 = pneg %p87
        %s160 = sand.u32 %s77, 1
        %s161 = scalar_lea.sflag [#allocation5], %s160
        %s162 = sand.u32 %s77, 1
        %s163 = smul.addr %s162, 4
        %s164 = scalar_lea.vmem [#allocation6], %s163
        %s165 = smul.u32 4, %s25
        %s166 = smul.u32 2, %s24
        %s167 = smul.u32 2, %s24
        %v168 = vld [vmem:[%s146] sm:$0xff]
        %v169 = vld [vmem:[%s146 + $0x8] sm:$0xff]
        %v170 = vld [vmem:[%s146 + $0x10] sm:$0xff]
        %v171 = vld [vmem:[%s146 + $0x18] sm:$0xff]
        %v172 = vld [vmem:[%s146 + $0x20] sm:$0xff]
        %v173 = vld [vmem:[%s146 + $0x28] sm:$0xff]
        %v174 = vld [vmem:[%s146 + $0x30] sm:$0xff]
        %v175 = vld [vmem:[%s146 + $0x38] sm:$0xff]
        %v176 = vadd.f32 %v168, %v170
        %v177 = vadd.f32 %v176, %v172
        %v178 = vadd.f32 %v177, %v174
        %v179 = vrot.slane %v178, 4
        %v180 = vadd.f32 %v178, %v179
        %v181 = vrot.slane %v180, 2
        %v182 = vadd.f32 %v180, %v181
        %v183 = vrot.slane %v182, 1
        %v184 = vadd.f32 %v182, %v183
        %v185 = vadd.f32 %v169, %v171
        %v186 = vadd.f32 %v185, %v173
        %v187 = vadd.f32 %v186, %v175
        %v188 = vrot.slane %v187, 4
        %v189 = vadd.f32 %v187, %v188
        %v190 = vrot.slane %v189, 2
        %v191 = vadd.f32 %v189, %v190
        %v192 = vrot.slane %v191, 1
        %v193 = vadd.f32 %v191, %v192
        %v194 = vmax.f32 %v168, %v172
        %v195 = vmax.f32 %v170, %v174
        %v196 = vmax.f32 %v194, %v195
        %v197 = vrot.slane %v196, 4
        %v198 = vmax.f32 %v196, %v197
        %v199 = vrot.slane %v198, 2
        %v200 = vmax.f32 %v198, %v199
        %v201 = vrot.slane %v200, 1
        %v202 = vmax.f32 %v200, %v201
        %v203 = vmax.f32 %v169, %v173
        %v204 = vmax.f32 %v171, %v175
        %v205 = vmax.f32 %v203, %v204
        %v206 = vrot.slane %v205, 4
        %v207 = vmax.f32 %v205, %v206
        %v208 = vrot.slane %v207, 2
        %v209 = vmax.f32 %v207, %v208
        %v210 = vrot.slane %v209, 1
        %v211 = vmax.f32 %v209, %v210
        %p212 = scmp.eq.s32.totalorder %s25, 0
        // Predicated region
        $region29: #{tpu_custom_call.1} parent=23 // pred_check
          %p213 = pneg %p212
        $region30: #{tpu_custom_call.1} parent=23 // pred_check_branch
          %215 = sbr.rel (%p213) target = $region32
        $region31: #{tpu_custom_call.1} parent=23 // pred_region
          %v218 = vcombine.low %v184, %v193
          %v220 = vunpack.c.l.s4 1966171168
          %v221 = vunpack.c.0.s8 %v220
          %v222 = vlaneseq
          %v223 = vshrl.u32 %v222, 7
          %v224 = vsub.s32 %v221, %v223
          %v225 = vrot.slane %v218, %v224
          %v227 = vunpack.c.l.s4 1966171168
          %v228 = vunpack.c.0.s8 %v227
          %v229 = vlaneseq
          %v230 = vshrl.u32 %v229, 7
          %v231 = vsub.s32 %v228, %v230
          %v232 = vrot.slane %v225, %v231
          %v234 = vlaneseq
          %vm235 = vcmp.ge.s32.totalorder %v234, 0
          %vm236 = vcmp.lt.s32.totalorder %v234, 256
          %vm237 = vmand %vm235, %vm236
          %238 = vst.msk [vmem:[#allocation2] ss:$2 sm:$0x3] %vm237, %v232
          %v241 = vcombine.low %v202, %v211
          %v243 = vunpack.c.l.s4 1966171168
          %v244 = vunpack.c.0.s8 %v243
          %v245 = vlaneseq
          %v246 = vshrl.u32 %v245, 7
          %v247 = vsub.s32 %v244, %v246
          %v248 = vrot.slane %v241, %v247
          %v250 = vunpack.c.l.s4 1966171168
          %v251 = vunpack.c.0.s8 %v250
          %v252 = vlaneseq
          %v253 = vshrl.u32 %v252, 7
          %v254 = vsub.s32 %v251, %v253
          %v255 = vrot.slane %v248, %v254
          %s257 = scalar_lea.vmem [#allocation2], 1
          %258 = vst.msk [vmem:[%s257] ss:$2 sm:$0x3] %vm237, %v255
        $region32: #{tpu_custom_call.1} parent=23 // pred_fallthru
          _
        %p259 = scmp.ne.s32.totalorder %s25, 0
        // Predicated region
        $region33: #{tpu_custom_call.1} parent=23 // pred_check
          %p260 = pneg %p259
        $region34: #{tpu_custom_call.1} parent=23 // pred_check_branch
          %262 = sbr.rel (%p260) target = $region36
        $region35: #{tpu_custom_call.1} parent=23 // pred_region
          %v263 = vld [vmem:[#allocation2] ss:$2 sm:$0x3]
          %v266 = vcombine.low %v184, %v193
          %v268 = vunpack.c.l.s4 1966171168
          %v269 = vunpack.c.0.s8 %v268
          %v270 = vlaneseq
          %v271 = vshrl.u32 %v270, 7
          %v272 = vsub.s32 %v269, %v271
          %v273 = vrot.slane %v266, %v272
          %v275 = vunpack.c.l.s4 1966171168
          %v276 = vunpack.c.0.s8 %v275
          %v277 = vlaneseq
          %v278 = vshrl.u32 %v277, 7
          %v279 = vsub.s32 %v276, %v278
          %v280 = vrot.slane %v273, %v279
          %v282 = vadd.f32 %v263, %v280
          %v283 = vlaneseq
          %vm284 = vcmp.ge.s32.totalorder %v283, 0
          %vm285 = vcmp.lt.s32.totalorder %v283, 256
          %vm286 = vmand %vm284, %vm285
          %287 = vst.msk [vmem:[#allocation2] ss:$2 sm:$0x3] %vm286, %v282
          %s288 = scalar_lea.vmem [#allocation2], 1
          %v289 = vld [vmem:[%s288] ss:$2 sm:$0x3]
          %v292 = vcombine.low %v202, %v211
          %v294 = vunpack.c.l.s4 1966171168
          %v295 = vunpack.c.0.s8 %v294
          %v296 = vlaneseq
          %v297 = vshrl.u32 %v296, 7
          %v298 = vsub.s32 %v295, %v297
          %v299 = vrot.slane %v292, %v298
          %v301 = vunpack.c.l.s4 1966171168
          %v302 = vunpack.c.0.s8 %v301
          %v303 = vlaneseq
          %v304 = vshrl.u32 %v303, 7
          %v305 = vsub.s32 %v302, %v304
          %v306 = vrot.slane %v299, %v305
          %v308 = vmax.f32 %v289, %v306
          %309 = vst.msk [vmem:[%s288] ss:$2 sm:$0x3] %vm286, %v308
        $region36: #{tpu_custom_call.1} parent=23 // pred_fallthru
          _
        // Predicated region
        $region37: #{tpu_custom_call.1} parent=23 // pred_check
          %p310 = pneg %p212
        $region38: #{tpu_custom_call.1} parent=23 // pred_check_branch
          %312 = sbr.rel (%p310) target = $region40
        $region39: #{tpu_custom_call.1} parent=23 // pred_region
          %v313 = vld [vmem:[#allocation2] ss:$2 sm:$0x3]
          %v314 = vmul.f32 %v313, 0.03125
          %v315 = vlaneseq
          %vm316 = vcmp.ge.s32.totalorder %v315, 0
          %vm317 = vcmp.lt.s32.totalorder %v315, 256
          %vm318 = vmand %vm316, %vm317
          %319 = vst.msk [vmem:[%s164] ss:$2 sm:$0x3] %vm318, %v314
          %s320 = scalar_lea.vmem [#allocation2], 1
          %v321 = vld [vmem:[%s320] ss:$2 sm:$0x3]
          %s322 = scalar_lea.vmem %s164, 1 [#allocation6]
          %323 = vst.msk [vmem:[%s322] ss:$2 sm:$0x3] %vm318, %v321
        $region40: #{tpu_custom_call.1} parent=23 // pred_fallthru
          _
        %s324 = sand.u32 %s77, 1
        %s325 = scalar_lea.sflag [#allocation5], %s324
        %s326 = sand.u32 %s77, 1
        %s327 = smul.addr %s326, 4
        %s328 = scalar_lea.vmem [#allocation6], %s327
        // Predicated region
        $region41: #{tpu_custom_call.1} parent=23 // pred_check
          %p329 = pneg %p87
        $region42: #{tpu_custom_call.1} parent=23 // pred_check_branch
          %331 = sbr.rel (%p329) target = $region44
        $region43: #{tpu_custom_call.1} parent=23 // pred_region
          %s332 = smul.u32 2, %s24
          %s334 = ssub.s32 64, 64
          %335 = vsyncadd %s325, %s334
          %s336 = smul.addr %s23, 2
          %s337 = sadd.s32 %s332, %s336
          %s338 = smul.addr %s337, 32
          %s339 = scalar_lea.hbm %s1, %s338
          %s341 = sshll.u32 %s328, 4
          %s342 = int_to_ptr.vmem [resolvable:$true] %s341
          %344 = dma.vmem_to_hbm [thread:$0]  %s342, 64, %s339, %s325
        $region44: #{tpu_custom_call.1} parent=23 // pred_fallthru
          _
      $region24: #{tpu_custom_call.1} parent=5 // pred_fallthru
        _
      %p345 = scmp.le.s32.totalorder 2, %s13
      // Predicated region
      $region45: #{tpu_custom_call.1} parent=5 // pred_check
        %p346 = pneg %p345
      $region46: #{tpu_custom_call.1} parent=5 // pred_check_branch
        %348 = sbr.rel (%p346) target = $region48
      $region47: #{tpu_custom_call.1} parent=5 // pred_region
        %s349 = ssub.s32 %s13, 2
        // Predicated region
        $region49: #{tpu_custom_call.1} parent=47 // pred_check
          %p350 = pneg %p93
        $region50: #{tpu_custom_call.1} parent=47 // pred_check_branch
          %352 = sbr.rel (%p350) target = $region52
        $region51: #{tpu_custom_call.1} parent=47 // pred_region
          %s353 = sand.u32 %s78, 1
          %s354 = scalar_lea.sflag [#allocation5], %s353
          %s355 = sand.u32 %s78, 1
          %s356 = smul.addr %s355, 4
          %s357 = scalar_lea.vmem [#allocation6], %s356
          %358 = dma.done %s354, 64
        $region52: #{tpu_custom_call.1} parent=47 // pred_fallthru
          _
      $region48: #{tpu_custom_call.1} parent=5 // pred_fallthru
        _
    $region6: #{tpu_custom_call.1} parent=1 // loop_footer
      %s17 = sadd.s32 1, %s13
    $region7: #{tpu_custom_call.1} parent=1 // loop_footer_branch
      %12 = sbr.rel target = $region3
    $region8: #{tpu_custom_call.1} parent=1 // loop_exit
      _
    %359 = vsyncpa [#allocation4], 1
    %s360 = scalar_lea.sflag [#allocation4], 1
    %361 = vsyncpa %s360, 1
    %362 = vsyncpa [#allocation5], 1
    %s363 = scalar_lea.sflag [#allocation5], 1
    %364 = vsyncpa %s363, 1

</llo_original>
